<compile_context>
chip_gen: v7x
topology: tpu7x:2x2x1
jax: 0.10.0
libtpu: 0.0.40
codegen_flags: <defaults>
</compile_context>

<pallas_src>
import jax
import jax.numpy as jnp
from jax.experimental import pallas as pl
from jax.experimental.pallas import tpu as pltpu

_LANES = 128
_SUBLANES = 8
_MAX_TILE_ROWS = 4096  # 4096 * 128 * 4 B = 2 MiB per f32 tile buffer


def _round_up(v, m):
    return -(-v // m) * m


def _logreg_kernel(w_ref, b_ref, x_ref, o_ref):
    # w_ref: (1,) f32 in SMEM, b_ref: (1,) f32 in SMEM.
    # x_ref / o_ref: (tile_r, 128) f32 tiles in VMEM.
    w = w_ref[0]
    b = b_ref[0]
    z = x_ref[...] * w + b
    # Exact, overflow-safe sigmoid using one EUP transcendental (tanh).
    o_ref[...] = 0.5 * jnp.tanh(0.5 * z) + 0.5


def logistic_regression(x, weight, bias):
    """x: (N, 1) f32, weight: (1, 1) f32, bias: (1,) f32 -> (N, 1) f32."""
    n, f = x.shape
    assert f == 1 and weight.shape == (1, 1) and bias.shape == (1,)

    # Lane-dense slab: (N, 1) -> flat -> (rows8, 128), padded only to one
    # 8x128 sublane tile (at most 1023 pad elements).
    rows = max(1, -(-n // _LANES))
    rows8 = _round_up(rows, _SUBLANES)
    n_pad = rows8 * _LANES

    x_flat = x.reshape(-1)
    if n_pad == n:
        # Zero-copy reshape: no pad op, no slice-back below.
        x2d = x_flat.reshape(rows8, _LANES)
    else:
        x2d = jnp.zeros((n_pad,), x.dtype).at[:n].set(x_flat).reshape(rows8, _LANES)

    # Tile rows: big enough for HBM roofline, but keep grid >= 2 steps so
    # v7x's two TensorCores both get work (when there are >= 16 rows).
    tile_r = min(_MAX_TILE_ROWS, _round_up(-(-rows8 // 2), _SUBLANES))
    grid_len = -(-rows8 // tile_r)  # partial last block handled by Pallas

    bytes_accessed = 2 * rows8 * _LANES * 4  # one read + one write pass, f32

    y2d = pl.pallas_call(
        _logreg_kernel,
        out_shape=jax.ShapeDtypeStruct((rows8, _LANES), x.dtype),
        grid_spec=pl.GridSpec(
            grid=(grid_len,),
            in_specs=[
                pl.BlockSpec(memory_space=pltpu.SMEM),             # weight (1,)
                pl.BlockSpec(memory_space=pltpu.SMEM),             # bias   (1,)
                pl.BlockSpec((tile_r, _LANES), lambda i: (i, 0)),  # x tile
            ],
            out_specs=pl.BlockSpec((tile_r, _LANES), lambda i: (i, 0)),
        ),
        compiler_params=pltpu.CompilerParams(
            dimension_semantics=("parallel",),  # shard row-tiles over v7x's 2 TCs
        ),
        cost_estimate=pl.CostEstimate(
            flops=2 * rows8 * _LANES,
            transcendentals=rows8 * _LANES,
            bytes_accessed=bytes_accessed,
        ),
    )(weight.reshape(-1), bias, x2d)

    y_flat = y2d.reshape(-1)
    if n_pad == n:
        return y_flat.reshape(n, 1)
    return y_flat[:n].reshape(n, 1)


if __name__ == "__main__":
    key = jax.random.PRNGKey(0)
    kx, kw, kb, kx2, kx3 = jax.random.split(key, 5)

    # Deterministic parameter init (nn.Linear(1, 1): U(-1, 1) for w and b).
    weight = jax.random.uniform(kw, (1, 1), jnp.float32, minval=-1.0, maxval=1.0)
    bias = jax.random.uniform(kb, (1,), jnp.float32, minval=-1.0, maxval=1.0)

    # Small batch of scalar features, shape (8, 1) as implied by Linear(1, 1).
    x = jax.random.normal(kx, (8, 1), jnp.float32)
    out = jax.block_until_ready(logistic_regression(x, weight, bias))
    ref = jax.nn.sigmoid(x @ weight.T + bias)
    assert out.shape == (8, 1)
    assert jnp.allclose(out, ref, atol=1e-5, rtol=1e-5), (out, ref)

    # Aligned batch (N % 1024 == 0): exercises the zero-copy pad/slice-free
    # path and a 2-step parallel grid.
    n_al = 2048
    x_al = jax.random.normal(kx3, (n_al, 1), jnp.float32)
    out_al = jax.block_until_ready(logistic_regression(x_al, weight, bias))
    ref_al = jax.nn.sigmoid(x_al @ weight.T + bias)
    assert out_al.shape == (n_al, 1)
    assert jnp.allclose(out_al, ref_al, atol=1e-5, rtol=1e-5)

    # Misaligned larger batch: exercises minimal padding, the partial last
    # grid block and the slice-back.
    n_big = 262_147  # -> 2049 rows -> 2056 padded rows, tile_r=1032, grid=2
    x_big = jax.random.normal(kx2, (n_big, 1), jnp.float32)
    out_big = jax.block_until_ready(logistic_regression(x_big, weight, bias))
    ref_big = jax.nn.sigmoid(x_big @ weight.T + bias)
    assert out_big.shape == (n_big, 1)
    assert jnp.allclose(out_big, ref_big, atol=1e-5, rtol=1e-5)

    print("KERNEL_OK")
</pallas_src>

<mosaic_0001>
module attributes {stable_mosaic.version = 11 : i64} {
  func.func @_logreg_kernel(%arg0: i32, %arg1: memref<1xf32, #tpu.memory_space<smem>>, %arg2: memref<1xf32, #tpu.memory_space<smem>>, %arg3: memref<8x128xf32, #tpu.memory_space<vmem>>, %arg4: memref<8x128xf32, #tpu.memory_space<vmem>>) attributes {dimension_semantics = [#tpu.dimension_semantics<parallel>], iteration_bounds = array<i64: 1>, scalar_prefetch = 0 : i64, scratch_operands = 0 : i64, tpu.core_type = #tpu.core_type<tc>, window_params = [{transform_indices = @transform_0, window_bounds = array<i64: 1>}, {transform_indices = @transform_1, window_bounds = array<i64: 1>}, {transform_indices = @transform_2, window_bounds = array<i64: 8, 128>}, {transform_indices = @transform_3, window_bounds = array<i64: 8, 128>}]} {
    %c0 = arith.constant 0 : index
    %0 = memref.load %arg1[%c0] : memref<1xf32, #tpu.memory_space<smem>>
    %c0_0 = arith.constant 0 : index
    %1 = memref.load %arg2[%c0_0] : memref<1xf32, #tpu.memory_space<smem>>
    %c0_1 = arith.constant 0 : index
    %c0_2 = arith.constant 0 : index
    %2 = vector.load %arg3[%c0_1, %c0_2] : memref<8x128xf32, #tpu.memory_space<vmem>>, vector<8x128xf32>
    %3 = vector.broadcast %0 : f32 to vector<8x128xf32>
    %4 = arith.mulf %2, %3 : vector<8x128xf32>
    %5 = vector.broadcast %1 : f32 to vector<8x128xf32>
    %6 = arith.addf %4, %5 : vector<8x128xf32>
    %cst = arith.constant 5.000000e-01 : f32
    %7 = vector.broadcast %cst : f32 to vector<8x128xf32>
    %8 = arith.mulf %7, %6 : vector<8x128xf32>
    %9 = math.tanh %8 : vector<8x128xf32>
    %cst_3 = arith.constant 5.000000e-01 : f32
    %10 = vector.broadcast %cst_3 : f32 to vector<8x128xf32>
    %11 = arith.mulf %10, %9 : vector<8x128xf32>
    %cst_4 = arith.constant 5.000000e-01 : f32
    %12 = vector.broadcast %cst_4 : f32 to vector<8x128xf32>
    %13 = arith.addf %11, %12 : vector<8x128xf32>
    %c0_5 = arith.constant 0 : index
    %c0_6 = arith.constant 0 : index
    %14 = vector.load %arg4[%c0_5, %c0_6] : memref<8x128xf32, #tpu.memory_space<vmem>>, vector<8x128xf32>
    tpu.vector_store %arg4[%c0_5, %c0_6], %13 {strides = array<i32>} : memref<8x128xf32, #tpu.memory_space<vmem>>, vector<8x128xf32>,
    return
  }
  func.func @transform_0(%arg0: i32) -> i32 {
    %c0_i32 = arith.constant 0 : i32
    %c0_i32_0 = arith.constant 0 : i32
    return %c0_i32 : i32
  }
  func.func @transform_1(%arg0: i32) -> i32 {
    %c0_i32 = arith.constant 0 : i32
    %c0_i32_0 = arith.constant 0 : i32
    return %c0_i32 : i32
  }
  func.func @transform_2(%arg0: i32) -> (i32, i32) {
    %c0_i32 = arith.constant 0 : i32
    %c0_i32_0 = arith.constant 0 : i32
    return %arg0, %c0_i32 : i32, i32
  }
  func.func @transform_3(%arg0: i32) -> (i32, i32) {
    %c0_i32 = arith.constant 0 : i32
    %c0_i32_0 = arith.constant 0 : i32
    return %arg0, %c0_i32 : i32, i32
  }
}

</mosaic_0001>

<llo_original>
// kernel: tpu_custom_call.1
$region0: #{tpu_custom_call.1}
  #allocation0 [shape = 'u32[]', space=smem, size = 0x4, offset = 0x4, fixed_abs, tag = 'smem constant byte address 0x4 - core index']
  #allocation1 [shape = 'u32[144,128]{1,0:T(1,128)}', space=vmem, size = 0x12000, scoped, tag = 'internal scratch']
  #allocation2 [shape = 'f32[1]{0:T(128)S(6)}', space=smem, size = 0x200, scoped, tag = 'scoped memory for tpu_custom_call.1']
  #allocation3 [shape = 'f32[1]{0:T(128)S(6)}', space=smem, size = 0x200, scoped, tag = 'scoped memory for tpu_custom_call.1']
  %s0 = inlined_call_operand.<no memory space> [shape: f32[1], index: 0, kind: input, shape index: {}]
  %s1 = inlined_call_operand.<no memory space> [shape: f32[1], index: 1, kind: input, shape index: {}]
  %s2 = inlined_call_operand.hbm [shape: f32[8,128], index: 2, kind: input, shape index: {}]
  %s3 = inlined_call_operand.hbm [shape: f32[8,128], index: 3, kind: output, shape index: {}]
  %s4 = sld [smem:[#allocation0]]
  $region26: #{tpu_custom_call.1} parent=0
    _
  %s6 = ssub.s32 1, %s4
  %s7 = scalar_select 0, %s6, %s4
  %8 = sst [smem:[#allocation2]] %s0
  %9 = sst [smem:[#allocation3]] %s1
  $region1: #{tpu_custom_call.1} parent=0
    #allocation4 [shape = 'u8[4096]{0}', space=vmem, size = 0x1000, scoped, tag = 'input window, operand 2, single buffered']
    #allocation5 [shape = 's32[1]{0}', space=sflag, size = 0x4, scoped, tag = 'scoped memory for tpu_custom_call.1']
    #allocation6 [shape = 's32[1]{0}', space=sflag, size = 0x4, scoped, tag = 'scoped memory for tpu_custom_call.1']
    #allocation7 [shape = 'u8[4096]{0}', space=vmem, size = 0x1000, scoped, tag = 'output window, operand 0, single buffered']
    %10 = vsyncpa [#allocation5], 0
    %11 = vsyncpa [#allocation6], 0
    // Predicated region
    $region2: #{tpu_custom_call.1} parent=1 // pred_check
      _
    $region3: #{tpu_custom_call.1} parent=1 // pred_check_branch
      %13 = sbr.rel (0) target = $region5
    $region4: #{tpu_custom_call.1} parent=1 // pred_region
      _
    $region5: #{tpu_custom_call.1} parent=1 // pred_fallthru
      _
    // Predicated region
    $region6: #{tpu_custom_call.1} parent=1 // pred_check
      _
    $region7: #{tpu_custom_call.1} parent=1 // pred_check_branch
      %15 = sbr.rel (0) target = $region9
    $region8: #{tpu_custom_call.1} parent=1 // pred_region
      _
    $region9: #{tpu_custom_call.1} parent=1 // pred_fallthru
      _
    // Predicated region
    $region10: #{tpu_custom_call.1} parent=1 // pred_check
      _
    $region11: #{tpu_custom_call.1} parent=1 // pred_check_branch
      %17 = sbr.rel (0) target = $region13
    $region12: #{tpu_custom_call.1} parent=1 // pred_region
      %s19 = ssub.s32 128, 128
      %20 = vsyncadd [#allocation5], %s19
      %s22 = sshll.u32 [#allocation4], 4
      %s23 = int_to_ptr.vmem [resolvable:$true] %s22
      %25 = dma.hbm_to_vmem [thread:$0]  %s2, 128, %s23, [#allocation5]
    $region13: #{tpu_custom_call.1} parent=1 // pred_fallthru
      _
    // Predicated region
    $region14: #{tpu_custom_call.1} parent=1 // pred_check
      _
    $region15: #{tpu_custom_call.1} parent=1 // pred_check_branch
      %27 = sbr.rel (0) target = $region17
    $region16: #{tpu_custom_call.1} parent=1 // pred_region
      %28 = dma.done [#allocation5], 128
    $region17: #{tpu_custom_call.1} parent=1 // pred_fallthru
      _
    %s29 = sld [smem:[#allocation2]]
    %s30 = sld [smem:[#allocation3]]
    %v31 = vld [vmem:[#allocation4] sm:$0xff]
    %v32 = vstv %s29
    %v33 = vmul.f32 %v31, %v32
    %v34 = vstv %s30
    %v35 = vadd.f32 %v33, %v34
    %v36 = vmul.f32 %v35, 0.5
    %v37 = vtanh.pop %v36
    %v38 = vmul.f32 %v37, 0.5
    %v39 = vadd.f32 %v38, 0.5
    %40 = vst [vmem:[#allocation7] sm:$0xff] %v39
    // Predicated region
    $region18: #{tpu_custom_call.1} parent=1 // pred_check
      _
    $region19: #{tpu_custom_call.1} parent=1 // pred_check_branch
      %42 = sbr.rel (0) target = $region21
    $region20: #{tpu_custom_call.1} parent=1 // pred_region
      %s44 = ssub.s32 128, 128
      %45 = vsyncadd [#allocation6], %s44
      %s47 = sshll.u32 [#allocation7], 4
      %s48 = int_to_ptr.vmem [resolvable:$true] %s47
      %50 = dma.vmem_to_hbm [thread:$0]  %s48, 128, %s3, [#allocation6]
    $region21: #{tpu_custom_call.1} parent=1 // pred_fallthru
      _
    // Predicated region
    $region22: #{tpu_custom_call.1} parent=1 // pred_check
      _
    $region23: #{tpu_custom_call.1} parent=1 // pred_check_branch
      %52 = sbr.rel (0) target = $region25
    $region24: #{tpu_custom_call.1} parent=1 // pred_region
      %53 = dma.done [#allocation6], 128
    $region25: #{tpu_custom_call.1} parent=1 // pred_fallthru
      _
    %54 = vsyncpa [#allocation5], 1
    %55 = vsyncpa [#allocation6], 1

</llo_original>
